<compile_context>
chip_gen: v7x
topology: tpu7x:2x2x1
jax: 0.10.0
libtpu: 0.0.40
codegen_flags: <defaults>
</compile_context>

<pallas_src>
import jax
import jax.numpy as jnp
from jax import lax
from jax.experimental import pallas as pl
from jax.experimental.pallas import tpu as pltpu

LANE = 128


def _vmem_cap_bytes():
    """Per-core VMEM capacity; conservative fallback (v7x = 64 MiB) if unavailable."""
    try:
        cap = getattr(pltpu.get_tpu_info(), "vmem_capacity_bytes", None)
        if cap:
            return int(cap)
    except Exception:
        pass
    return 64 << 20


def _pick_m_tile(m, k, cpad, budget_bytes, tm_cap=4096):
    """Largest M tile (multiple of 16, <= tm_cap) whose per-step footprint fits."""
    per_row = (2 * k * 2          # double-buffered bf16 LHS rows
               + 2 * cpad * 2     # double-buffered bf16 output rows
               + cpad * 4         # f32 accumulator row (value; may spill)
               + k * 4)           # headroom for widened operands near the MXU
    tm = min(tm_cap, budget_bytes // per_row)
    tm = (tm // 16) * 16
    if tm < 16:
        raise ValueError("VMEM budget too small for even a 16-row M tile")
    m16 = ((m + 15) // 16) * 16
    return min(tm, m16)


# ----------------------------- Pallas kernel ---------------------------------
def _im2col_matmul_kernel(x_ref, w_ref, b_ref, o_ref):
    """One fused conv tile: (TM, K) @ (K, Cpad) + bias, K = 9*Cin.

    x_ref: (1, TM, K)    bf16 im2col patches for one (batch, M-tile) block
    w_ref: (K, Cpad)     bf16 folded 3x3 weights (single resident VMEM copy)
    b_ref: (1, Cpad)     f32 bias (Cout zero-padded to lane width)
    o_ref: (1, TM, Cpad) bf16 output tile (lane-dense, unmasked stores)
    """
    acc = jnp.dot(x_ref[0], w_ref[...], preferred_element_type=jnp.float32)
    o_ref[0] = (acc + b_ref[...]).astype(o_ref.dtype)


def _conv_as_matmul(patches, w2, b2, *, tm):
    """patches: (B, Mp, K) bf16 -> (B, Mp, Cpad) bf16 via one dot per grid step."""
    B, Mp, K = patches.shape
    Cpad = w2.shape[-1]
    n_m = Mp // tm

    # Explicit per-step VMEM footprint; fail loudly rather than silently clamp.
    vmem_need = (2 * tm * K * 2 + 2 * tm * Cpad * 2        # pipelined LHS / out
                 + K * Cpad * 2 + Cpad * 4                 # resident weights / bias
                 + tm * Cpad * 4 + tm * K * 4)             # f32 acc + widening headroom
    cap = _vmem_cap_bytes()
    if vmem_need > cap:
        raise ValueError(f"per-step VMEM need {vmem_need} B exceeds capacity {cap} B")
    vmem_limit = int(min(max(2 * vmem_need, 4 << 20), cap))

    return pl.pallas_call(
        _im2col_matmul_kernel,
        out_shape=jax.ShapeDtypeStruct((B, Mp, Cpad), jnp.bfloat16),
        grid=(B, n_m),
        in_specs=[
            pl.BlockSpec((1, tm, K), lambda b, m: (b, m, 0)),
            # Weights / bias: constant across the grid -> one resident VMEM copy,
            # no per-step double buffering or re-DMA.
            pl.BlockSpec(memory_space=pltpu.MemorySpace.VMEM),
            pl.BlockSpec(memory_space=pltpu.MemorySpace.VMEM),
        ],
        out_specs=pl.BlockSpec((1, tm, Cpad), lambda b, m: (b, m, 0)),
        compiler_params=pltpu.CompilerParams(
            dimension_semantics=("parallel", "parallel"),
            vmem_limit_bytes=vmem_limit),
    )(patches, w2, b2)


# ----------------------------- Module forward --------------------------------
@jax.jit
def downsample_forward(x_nchw, w_oihw, bias):
    """PixelUnshuffle(2) + Conv2d(4C, C, 3, 1, 1).  NCHW in/out like PyTorch."""
    B, C, H, W = x_nchw.shape
    r = 2
    Hp, Wp = H // r, W // r
    Cin = C * r * r
    Cout = w_oihw.shape[0]
    Cpad = pl.cdiv(Cout, LANE) * LANE
    K = 9 * Cin
    M = Hp * Wp

    # Fused producer: PixelUnshuffle + NCHW->NHWC + halo pad + im2col + bf16 cast.
    x = x_nchw.reshape(B, C, Hp, r, Wp, r)
    x = jnp.transpose(x, (0, 2, 4, 1, 3, 5)).reshape(B, Hp, Wp, Cin)
    xp = jnp.pad(x, ((0, 0), (1, 1), (1, 1), (0, 0)))
    patches = jnp.concatenate(
        [xp[:, kh:kh + Hp, kw:kw + Wp, :] for kh in range(3) for kw in range(3)],
        axis=-1)                                            # (B, Hp, Wp, 9*Cin)
    patches = patches.reshape(B, M, K).astype(jnp.bfloat16)

    # Weights: OIHW -> (kh, kw, ci, co) -> (9*Cin, Cout); Cout padded to lanes; bf16.
    w2 = jnp.transpose(w_oihw, (2, 3, 1, 0)).reshape(K, Cout)
    w2 = jnp.pad(w2, ((0, 0), (0, Cpad - Cout))).astype(jnp.bfloat16)
    b2 = jnp.pad(bias, (0, Cpad - Cout)).reshape(1, Cpad).astype(jnp.float32)

    tm = _pick_m_tile(M, K, Cpad, budget_bytes=_vmem_cap_bytes() // 2)
    Mp = pl.cdiv(M, tm) * tm
    if Mp != M:
        patches = jnp.pad(patches, ((0, 0), (0, Mp - M), (0, 0)))

    y = _conv_as_matmul(patches, w2, b2, tm=tm)             # (B, Mp, Cpad) bf16

    # Strip M / Cout padding, widen to f32, back to NCHW (fused epilogue).
    y = y[:, :M, :Cout].reshape(B, Hp, Wp, Cout).astype(jnp.float32)
    return jnp.transpose(y, (0, 3, 1, 2))


# ----------------------------------- main -------------------------------------
if __name__ == "__main__":
    B, C, H, W = 2, 4, 16, 16
    Cin, Cout = 4 * C, C

    key = jax.random.PRNGKey(0)
    kx, kw_, kb = jax.random.split(key, 3)

    x = jax.random.normal(kx, (B, C, H, W), dtype=jnp.float32)
    # Deterministic synthetic Conv2d params (PyTorch weight layout OIHW).
    fan_in = Cin * 3 * 3
    bound = 1.0 / (fan_in ** 0.5)
    w_oihw = jax.random.uniform(kw_, (Cout, Cin, 3, 3), jnp.float32, -bound, bound)
    bias = jax.random.uniform(kb, (Cout,), jnp.float32, -bound, bound)

    y = downsample_forward(x, w_oihw, bias)
    y = jax.block_until_ready(y)
    assert y.shape == (B, C, H // 2, W // 2)

    # Pure-JAX reference of the same forward (same bf16 operands, f32 accumulation).
    x_u = x.reshape(B, C, H // 2, 2, W // 2, 2)
    x_u = jnp.transpose(x_u, (0, 1, 3, 5, 2, 4)).reshape(B, 4 * C, H // 2, W // 2)
    y_ref = lax.conv_general_dilated(
        x_u.astype(jnp.bfloat16), w_oihw.astype(jnp.bfloat16),
        window_strides=(1, 1), padding=((1, 1), (1, 1)),
        dimension_numbers=("NCHW", "OIHW", "NCHW"),
        preferred_element_type=jnp.float32) + bias[None, :, None, None]
    # Kernel stores bf16 (one extra rounding step vs the f32 reference).
    assert jnp.allclose(y, y_ref, atol=2e-2, rtol=2e-2), \
        float(jnp.max(jnp.abs(y - y_ref)))

    print("KERNEL_OK")
</pallas_src>

<mosaic_0001>
module attributes {stable_mosaic.version = 11 : i64} {
  func.func @_im2col_matmul_kernel(%arg0: i32, %arg1: i32, %arg2: memref<1x64x144xbf16, #tpu.memory_space<vmem>>, %arg3: memref<144x128xbf16, #tpu.memory_space<vmem>>, %arg4: memref<1x128xf32, #tpu.memory_space<vmem>>, %arg5: memref<1x64x128xbf16, #tpu.memory_space<vmem>>) attributes {dimension_semantics = [#tpu.dimension_semantics<parallel>, #tpu.dimension_semantics<parallel>], iteration_bounds = array<i64: 2, 1>, scalar_prefetch = 0 : i64, scratch_operands = 0 : i64, tpu.core_type = #tpu.core_type<tc>, window_params = [{transform_indices = @transform_0, window_bounds = array<i64: 1, 64, 144>}, {pipeline_mode = #tpu.pipeline_mode<synchronous>, transform_indices = @transform_1, window_bounds = array<i64: 144, 128>}, {pipeline_mode = #tpu.pipeline_mode<synchronous>, transform_indices = @transform_2, window_bounds = array<i64: 1, 128>}, {transform_indices = @transform_3, window_bounds = array<i64: 1, 64, 128>}]} {
    %c0 = arith.constant 0 : index
    %c0_0 = arith.constant 0 : index
    %c0_1 = arith.constant 0 : index
    %0 = vector.load %arg2[%c0, %c0_0, %c0_1] : memref<1x64x144xbf16, #tpu.memory_space<vmem>>, vector<1x64x144xbf16>
    %1 = vector.shape_cast %0 : vector<1x64x144xbf16> to vector<64x144xbf16>
    %c0_2 = arith.constant 0 : index
    %c0_3 = arith.constant 0 : index
    %2 = vector.load %arg3[%c0_2, %c0_3] : memref<144x128xbf16, #tpu.memory_space<vmem>>, vector<144x128xbf16>
    %cst = arith.constant dense<0.000000e+00> : vector<64x128xf32>
    %3 = tpu.matmul %1, %2, %cst {dimension_numbers = #tpu.dot_dimension_numbers<[1], [0], [0], [1], [0, 0, 1, 1], [], []>} : vector<64x144xbf16>, vector<144x128xbf16>, vector<64x128xf32> -> vector<64x128xf32>
    %c0_4 = arith.constant 0 : index
    %c0_5 = arith.constant 0 : index
    %4 = vector.load %arg4[%c0_4, %c0_5] : memref<1x128xf32, #tpu.memory_space<vmem>>, vector<1x128xf32>
    %5 = vector.broadcast %4 : vector<1x128xf32> to vector<64x128xf32>
    %6 = arith.addf %3, %5 : vector<64x128xf32>
    %7 = arith.truncf %6 : vector<64x128xf32> to vector<64x128xbf16>
    %c0_6 = arith.constant 0 : index
    %c0_7 = arith.constant 0 : index
    %c0_8 = arith.constant 0 : index
    %8 = vector.load %arg5[%c0_6, %c0_7, %c0_8] : memref<1x64x128xbf16, #tpu.memory_space<vmem>>, vector<1x64x128xbf16>
    %9 = vector.shape_cast %8 : vector<1x64x128xbf16> to vector<64x128xbf16>
    %10 = vector.shape_cast %7 : vector<64x128xbf16> to vector<1x64x128xbf16>
    tpu.vector_store %arg5[%c0_6, %c0_7, %c0_8], %10 {strides = array<i32>} : memref<1x64x128xbf16, #tpu.memory_space<vmem>>, vector<1x64x128xbf16>,
    return
  }
  func.func @transform_0(%arg0: i32, %arg1: i32) -> (i32, i32, i32) {
    %c0_i32 = arith.constant 0 : i32
    %c0_i32_0 = arith.constant 0 : i32
    return %arg0, %arg1, %c0_i32 : i32, i32, i32
  }
  func.func @transform_1(%arg0: i32, %arg1: i32) -> (i32, i32) {
    %c0_i32 = arith.constant 0 : i32
    %c0_i32_0 = arith.constant 0 : i32
    %c0_i32_1 = arith.constant 0 : i32
    return %c0_i32, %c0_i32_0 : i32, i32
  }
  func.func @transform_2(%arg0: i32, %arg1: i32) -> (i32, i32) {
    %c0_i32 = arith.constant 0 : i32
    %c0_i32_0 = arith.constant 0 : i32
    %c0_i32_1 = arith.constant 0 : i32
    return %c0_i32, %c0_i32_0 : i32, i32
  }
  func.func @transform_3(%arg0: i32, %arg1: i32) -> (i32, i32, i32) {
    %c0_i32 = arith.constant 0 : i32
    %c0_i32_0 = arith.constant 0 : i32
    return %arg0, %arg1, %c0_i32 : i32, i32, i32
  }
}

</mosaic_0001>

<llo_original>
// kernel: downsample_forward.1
$region0: #{downsample_forward.1}
  #allocation0 [shape = 'u32[]', space=smem, size = 0x4, offset = 0x4, fixed_abs, tag = 'smem constant byte address 0x4 - core index']
  #allocation1 [shape = 'u32[144,128]{1,0:T(1,128)}', space=vmem, size = 0x12000, scoped, tag = 'internal scratch']
  %s0 = inlined_call_operand.vmem [shape: bf16[2,64,144], index: 0, kind: input, shape index: {}]
  %s1 = inlined_call_operand.vmem [shape: bf16[144,128], index: 1, kind: input, shape index: {}]
  %s2 = inlined_call_operand.vmem [shape: f32[1,128], index: 2, kind: input, shape index: {}]
  %s3 = inlined_call_operand.vmem [shape: bf16[2,64,128], index: 3, kind: output, shape index: {}]
  %s4 = sld [smem:[#allocation0]]
  $region45: #{downsample_forward.1} parent=0
    _
  %s6 = ssub.s32 1, %s4
  %s7 = scalar_select 0, %s6, %s4
  loop: start=0, step=1, limit=4
  $region2: #{downsample_forward.1} parent=0 // loop_pre_header
    _
  $region3: #{downsample_forward.1} parent=0 // loop_header
    %s9 = sphi 0, %s13
    %p10 = scmp.ge.s32.totalorder %s9, 4
    %s16 = sphi 0, %s28
    %s17 = sphi 0, %s24
    %s18 = sphi 0, %s16
    %s19 = sphi 0, %s17
    %s20 = sphi 0, %s18
    %s21 = sphi 0, %s19
    %s33 = sphi 0, %s35
    %s36 = sphi 0, %s33
    %s37 = sphi 0, %s36
    %s53 = sphi 0, %s37
    %s57 = sphi 0, %s57
    %s59 = sphi 0, %s57
    %s60 = sphi 0, %s59
    %s74 = sphi 0, %s60
    %s78 = sphi 0, %s78
    %s80 = sphi 0, %s78
    %s81 = sphi 0, %s80
    %s95 = sphi 0, %s81
    %s103 = sphi 0, %s105
    %s106 = sphi 0, %s103
    %s107 = sphi 0, %s106
    %s123 = sphi 0, %s107
  $region4: #{downsample_forward.1} parent=0 // loop_header_branch
    %12 = sbr.rel (%p10) target = $region8
  $region5: #{downsample_forward.1} parent=0 // loop_body
    %s14 = ssub.s32 %s9, 1
    %s15 = ssub.s32 %s9, 2
    %s22 = sadd.s32 1, %s17
    %p23 = scmp.ge.s32.totalorder %s22, 1
    %s24 = scalar_select %p23, 0, %s22
    %s25 = sadd.s32 1, %s16
    %s26 = scalar_select %p23, %s25, %s16
    %p27 = scmp.ge.s32.totalorder %s26, 2
    %s28 = scalar_select %p27, 0, %s26
    %s29 = ssub.s32 %s16, %s28
    %s30 = ssub.s32 %s17, %s24
    %s31 = sor.u32 %s29, %s30
    %p32 = scmp.eq.s32.totalorder %s31, 0
    %s34 = sadd.s32 %s33, 1
    %s35 = scalar_select %p32, %s33, %s34
    %p38 = pneg %p32
    %p39 = scmp.eq.s32.totalorder %s9, 1
    %p40 = por %p38, %p39
    %p41 = scmp.ne.s32.totalorder %s33, %s36
    %p42 = scmp.eq.s32.totalorder %s9, 0
    %p43 = por %p41, %p42
    %p44 = scmp.ne.s32.totalorder %s33, %s36
    %p45 = scmp.eq.s32.totalorder %s14, 1
    %p46 = por %p44, %p45
    %p47 = scmp.ne.s32.totalorder %s36, %s37
    %p48 = scmp.eq.s32.totalorder %s14, 0
    %p49 = por %p47, %p48
    %p50 = scmp.ne.s32.totalorder %s36, %s37
    %p51 = scmp.eq.s32.totalorder %s15, 1
    %p52 = por %p50, %p51
    %p54 = scmp.ne.s32.totalorder %s37, %s53
    %p55 = scmp.eq.s32.totalorder %s15, 0
    %p56 = por %p54, %p55
    %s58 = sadd.s32 %s57, 1
    %p61 = scmp.eq.s32.totalorder %s9, 1
    %p62 = scmp.ne.s32.totalorder %s57, %s59
    %p63 = scmp.eq.s32.totalorder %s9, 0
    %p64 = por %p62, %p63
    %p65 = scmp.ne.s32.totalorder %s57, %s59
    %p66 = scmp.eq.s32.totalorder %s14, 1
    %p67 = por %p65, %p66
    %p68 = scmp.ne.s32.totalorder %s59, %s60
    %p69 = scmp.eq.s32.totalorder %s14, 0
    %p70 = por %p68, %p69
    %p71 = scmp.ne.s32.totalorder %s59, %s60
    %p72 = scmp.eq.s32.totalorder %s15, 1
    %p73 = por %p71, %p72
    %p75 = scmp.ne.s32.totalorder %s60, %s74
    %p76 = scmp.eq.s32.totalorder %s15, 0
    %p77 = por %p75, %p76
    %s79 = sadd.s32 %s78, 1
    %p82 = scmp.eq.s32.totalorder %s9, 1
    %p83 = scmp.ne.s32.totalorder %s78, %s80
    %p84 = scmp.eq.s32.totalorder %s9, 0
    %p85 = por %p83, %p84
    %p86 = scmp.ne.s32.totalorder %s78, %s80
    %p87 = scmp.eq.s32.totalorder %s14, 1
    %p88 = por %p86, %p87
    %p89 = scmp.ne.s32.totalorder %s80, %s81
    %p90 = scmp.eq.s32.totalorder %s14, 0
    %p91 = por %p89, %p90
    %p92 = scmp.ne.s32.totalorder %s80, %s81
    %p93 = scmp.eq.s32.totalorder %s15, 1
    %p94 = por %p92, %p93
    %p96 = scmp.ne.s32.totalorder %s81, %s95
    %p97 = scmp.eq.s32.totalorder %s15, 0
    %p98 = por %p96, %p97
    %s99 = ssub.s32 %s16, %s28
    %s100 = ssub.s32 %s17, %s24
    %s101 = sor.u32 %s99, %s100
    %p102 = scmp.eq.s32.totalorder %s101, 0
    %s104 = sadd.s32 %s103, 1
    %s105 = scalar_select %p102, %s103, %s104
    %p108 = pneg %p102
    %p109 = scmp.eq.s32.totalorder %s9, 1
    %p110 = por %p108, %p109
    %p111 = scmp.ne.s32.totalorder %s103, %s106
    %p112 = scmp.eq.s32.totalorder %s9, 0
    %p113 = por %p111, %p112
    %p114 = scmp.ne.s32.totalorder %s103, %s106
    %p115 = scmp.eq.s32.totalorder %s14, 1
    %p116 = por %p114, %p115
    %p117 = scmp.ne.s32.totalorder %s106, %s107
    %p118 = scmp.eq.s32.totalorder %s14, 0
    %p119 = por %p117, %p118
    %p120 = scmp.ne.s32.totalorder %s106, %s107
    %p121 = scmp.eq.s32.totalorder %s15, 1
    %p122 = por %p120, %p121
    %p124 = scmp.ne.s32.totalorder %s107, %s123
    %p125 = scmp.eq.s32.totalorder %s15, 0
    %p126 = por %p124, %p125
    %p127 = scmp.le.s32.totalorder 1, %s9
    %p128 = scmp.lt.s32.totalorder %s9, 3
    %p129 = pnand %p127, %p128
    %p130 = pneg %p129
    // Predicated region
    $region9: #{downsample_forward.1} parent=5 // pred_check
      _
    $region10: #{downsample_forward.1} parent=5 // pred_check_branch
      %132 = sbr.rel (%p129) target = $region12
    $region11: #{downsample_forward.1} parent=5 // pred_region
      %s133 = ssub.s32 %s9, 1
      // Predicated region
      $region13: #{downsample_forward.1} parent=11 // pred_check
        %p134 = pneg %p70
      $region14: #{downsample_forward.1} parent=11 // pred_check_branch
        %136 = sbr.rel (%p134) target = $region16
      $region15: #{downsample_forward.1} parent=11 // pred_region
        _
      $region16: #{downsample_forward.1} parent=11 // pred_fallthru
        _
      // Predicated region
      $region17: #{downsample_forward.1} parent=11 // pred_check
        %p137 = pneg %p91
      $region18: #{downsample_forward.1} parent=11 // pred_check_branch
        %139 = sbr.rel (%p137) target = $region20
      $region19: #{downsample_forward.1} parent=11 // pred_region
        _
      $region20: #{downsample_forward.1} parent=11 // pred_fallthru
        _
    $region12: #{downsample_forward.1} parent=5 // pred_fallthru
      _
    %p140 = scmp.lt.s32.totalorder %s9, 2
    // Predicated region
    $region21: #{downsample_forward.1} parent=5 // pred_check
      %p141 = pneg %p140
    $region22: #{downsample_forward.1} parent=5 // pred_check_branch
      %143 = sbr.rel (%p141) target = $region24
    $region23: #{downsample_forward.1} parent=5 // pred_region
      // Predicated region
      $region25: #{downsample_forward.1} parent=23 // pred_check
        %p144 = pneg %p43
      $region26: #{downsample_forward.1} parent=23 // pred_check_branch
        %146 = sbr.rel (%p144) target = $region28
      $region27: #{downsample_forward.1} parent=23 // pred_region
        %s147 = smul.u32 8, %s17
        %p148 = scmp.lt.s32.totalorder %s16, 1
        %s149 = scalar_select %p148, %s16, 1
        %p150 = scmp.lt.s32.totalorder %s147, 7
        %s151 = scalar_select %p150, %s147, 7
        %s152 = smul.addr %s151, 2
        %s153 = smul.addr %s149, 16
        %s154 = sadd.s32 %s152, %s153
        %s155 = smul.addr %s154, 4
        %s156 = scalar_lea.vmem %s0, %s155
        %s157 = smul.u32 8, %s17
      $region28: #{downsample_forward.1} parent=23 // pred_fallthru
        _
    $region24: #{downsample_forward.1} parent=5 // pred_fallthru
      _
    %p158 = scmp.le.s32.totalorder 1, %s9
    %p159 = scmp.lt.s32.totalorder %s9, 3
    %p160 = pnand %p158, %p159
    %p161 = pneg %p160
    // Predicated region
    $region29: #{downsample_forward.1} parent=5 // pred_check
      _
    $region30: #{downsample_forward.1} parent=5 // pred_check_branch
      %163 = sbr.rel (%p160) target = $region32
    $region31: #{downsample_forward.1} parent=5 // pred_region
      %s164 = ssub.s32 %s9, 1
      %s165 = smul.u32 8, %s19
      %p166 = scmp.lt.s32.totalorder %s18, 1
      %s167 = scalar_select %p166, %s18, 1
      %p168 = scmp.lt.s32.totalorder %s165, 7
      %s169 = scalar_select %p168, %s165, 7
      %s170 = smul.addr %s169, 2
      %s171 = smul.addr %s167, 16
      %s172 = sadd.s32 %s170, %s171
      %s173 = smul.addr %s172, 4
      %s174 = scalar_lea.vmem %s0, %s173
      %p175 = pneg %p49
      %p176 = pneg %p46
      %p177 = pneg %p70
      %p178 = pneg %p67
      %p179 = pneg %p91
      %p180 = pneg %p88
      %p181 = pneg %p119
      %p182 = pneg %p116
      %s183 = smul.u32 8, %s19
      %p184 = scmp.lt.s32.totalorder %s18, 1
      %s185 = scalar_select %p184, %s18, 1
      %p186 = scmp.lt.s32.totalorder %s183, 7
      %s187 = scalar_select %p186, %s183, 7
      %s188 = smul.addr %s185, 8
      %s189 = sadd.s32 %s187, %s188
      %s190 = smul.addr %s189, 4
      %s191 = scalar_lea.vmem %s3, %s190
      %s192 = smul.u32 8, %s19
      %p193 = scmp.lt.s32.totalorder %s18, 1
      %s194 = scalar_select %p193, %s18, 1
      %p195 = scmp.lt.s32.totalorder %s192, 7
      %s196 = scalar_select %p195, %s192, 7
      %s197 = smul.addr %s196, 2
      %s198 = smul.addr %s194, 16
      %s199 = sadd.s32 %s197, %s198
      %s200 = smul.addr %s199, 4
      %s201 = scalar_lea.vmem %s0, %s200
      %s202 = smul.u32 8, %s19
      %s203 = smul.u32 8, %s19
      %p204 = scmp.lt.s32.totalorder %s18, 1
      %s205 = scalar_select %p204, %s18, 1
      %p206 = scmp.lt.s32.totalorder %s203, 7
      %s207 = scalar_select %p206, %s203, 7
      %s208 = smul.addr %s205, 8
      %s209 = sadd.s32 %s207, %s208
      %s210 = smul.addr %s209, 4
      %s211 = scalar_lea.vmem %s3, %s210
      %s212 = smul.u32 8, %s19
      %v214 = vld [vmem:[%s201] sm:$0xff]
      %v215 = vld [vmem:[%s201 + $0x8] sm:$0xff]
      %v216 = vld [vmem:[%s201 + $0x10] sm:$0xff]
      %v217 = vld [vmem:[%s201 + $0x18] sm:$0xff]
      %v218 = vld [vmem:[%s201 + $0x20] sm:$0xff]
      %v219 = vld [vmem:[%s201 + $0x28] sm:$0xff]
      %v220 = vld [vmem:[%s201 + $0x30] sm:$0xff]
      %v221 = vld [vmem:[%s201 + $0x38] sm:$0xff]
      %v222 = vld [vmem:[%s1] sm:$0xf]
      %v223 = vld [vmem:[%s1 + $0x4] sm:$0xf]
      %v224 = vld [vmem:[%s1 + $0x8] sm:$0xf]
      %v225 = vld [vmem:[%s1 + $0xc] sm:$0xf]
      %v226 = vld [vmem:[%s1 + $0x10] sm:$0xf]
      %v227 = vld [vmem:[%s1 + $0x14] sm:$0xf]
      %v228 = vld [vmem:[%s1 + $0x18] sm:$0xf]
      %v229 = vld [vmem:[%s1 + $0x1c] sm:$0xf]
      %v230 = vld [vmem:[%s1 + $0x20] sm:$0xf]
      %v231 = vld [vmem:[%s1 + $0x24] sm:$0xf]
      %v232 = vld [vmem:[%s1 + $0x28] sm:$0xf]
      %v233 = vld [vmem:[%s1 + $0x2c] sm:$0xf]
      %v234 = vld [vmem:[%s1 + $0x30] sm:$0xf]
      %v235 = vld [vmem:[%s1 + $0x34] sm:$0xf]
      %v236 = vld [vmem:[%s1 + $0x38] sm:$0xf]
      %v237 = vld [vmem:[%s1 + $0x3c] sm:$0xf]
      %v238 = vld [vmem:[%s1 + $0x40] sm:$0xf]
      %v239 = vld [vmem:[%s1 + $0x44] sm:$0xf]
      %v240 = vld [vmem:[%s2] sm:$0x1]
      %v242 = vlaneseq
      %v243 = vshrl.u32 %v242, 7
      %v244 = vsub.s32 0, %v243
      %v245 = vrot.slane %v240, %v244
      %v255 = vunpack.c.l.b16 %v214
      %v256 = vunpack.c.h.b16 %v214
      %v257 = vunpack.c.l.b16 %v215
      %v258 = vunpack.c.h.b16 %v215
      %v259 = vunpack.c.l.b16 %v216
      %v260 = vunpack.c.h.b16 %v216
      %v261 = vunpack.c.l.b16 %v217
      %v262 = vunpack.c.h.b16 %v217
      %v263 = vunpack.c.l.b16 %v218
      %v264 = vunpack.c.h.b16 %v218
      %v265 = vunpack.c.l.b16 %v219
      %v266 = vunpack.c.h.b16 %v219
      %v267 = vunpack.c.l.b16 %v220
      %v268 = vunpack.c.h.b16 %v220
      %v269 = vunpack.c.l.b16 %v221
      %v270 = vunpack.c.h.b16 %v221
      %v271 = vpack.c.b16 %v257, %v255
      %v272 = vpack.c.b16 %v258, %v256
      %v273 = vpack.c.b16 %v261, %v259
      %v274 = vpack.c.b16 %v262, %v260
      %v275 = vpack.c.b16 %v265, %v263
      %v276 = vpack.c.b16 %v266, %v264
      %v277 = vpack.c.b16 %v269, %v267
      %v278 = vpack.c.b16 %v270, %v268
      %v301 = vunpack.c.l.b16 %v222
      %v302 = vunpack.c.l.b16 %v223
      %v303 = vunpack.c.l.b16 %v224
      %v304 = vunpack.c.l.b16 %v225
      %v305 = vunpack.c.l.b16 %v226
      %v306 = vunpack.c.l.b16 %v227
      %v307 = vunpack.c.l.b16 %v228
      %v308 = vunpack.c.l.b16 %v229
      %v309 = vunpack.c.l.b16 %v230
      %v310 = vunpack.c.l.b16 %v231
      %v311 = vunpack.c.l.b16 %v232
      %v312 = vunpack.c.l.b16 %v233
      %v313 = vunpack.c.l.b16 %v234
      %v314 = vunpack.c.l.b16 %v235
      %v315 = vunpack.c.l.b16 %v236
      %v316 = vunpack.c.l.b16 %v237
      %v317 = vunpack.c.l.b16 %v238
      %v318 = vunpack.c.l.b16 %v239
      %v319 = vpack.c.b16 %v302, %v301
      %v320 = vpack.c.b16 %v304, %v303
      %v321 = vpack.c.b16 %v306, %v305
      %v322 = vpack.c.b16 %v308, %v307
      %v323 = vpack.c.b16 %v310, %v309
      %v324 = vpack.c.b16 %v312, %v311
      %v325 = vpack.c.b16 %v314, %v313
      %v326 = vpack.c.b16 %v316, %v315
      %v327 = vpack.c.b16 %v318, %v317
      %vm337 = vcmask 130048
      %v339 = vsel %vm337, %v272, 0
      %v342 = vsel %vm337, %v274, 0
      %v345 = vsel %vm337, %v276, 0
      %v348 = vsel %vm337, %v278, 0
      %350 = vmatprep.subr.bf16.mxu0 0
      %351 = vmatpush1.bf16.msra.mxu0 %v319
      %352 = vmatprep.subr.bf16.mxu0 0
      %353 = vmatpush1.bf16.msra.mxu0 %v320
      %354 = vmatprep.subr.bf16.mxu0 0
      %355 = vmatpush1.bf16.msra.mxu0 %v321
      %356 = vmatprep.subr.bf16.mxu0 0
      %357 = vmatpush1.bf16.msra.mxu0 %v322
      %358 = vmatprep.subr.bf16.mxu0 0
      %359 = vmatpush1.bf16.msra.mxu0 %v323
      %360 = vmatprep.subr.bf16.mxu0 0
      %361 = vmatpush1.bf16.msra.mxu0 %v324
      %362 = vmatprep.subr.bf16.mxu0 0
      %363 = vmatpush1.bf16.msra.mxu0 %v325
      %364 = vmatprep.subr.bf16.mxu0 0
      %365 = vmatpush1.bf16.msra.mxu0 %v326
      %366 = vmatprep.subr.bf16.mxu0 0
      %367 = vmatpush1.bf16.msra.mxu0 %v327
      %368 = vmatprep.subr.bf16.mxu0 0
      %369 = vmatpush1.bf16.msra.mxu0 0
      %370 = vmatprep.subr.bf16.mxu0 0
      %371 = vmatpush1.bf16.msra.mxu0 0
      %372 = vmatprep.subr.bf16.mxu0 0
      %373 = vmatpush1.bf16.msra.mxu0 0
      %374 = vmatprep.subr.bf16.mxu0 0
      %375 = vmatpush1.bf16.msra.mxu0 0
      %376 = vmatprep.subr.bf16.mxu0 0
      %377 = vmatpush1.bf16.msra.mxu0 0
      %378 = vmatprep.subr.bf16.mxu0 0
      %379 = vmatpush1.bf16.msra.mxu0 0
      %380 = vmatprep.subr.bf16.mxu0 0
      %381 = vmatpush1.bf16.msra.mxu0 0
      %382 = vmatprep.mubr.bf16.mxu0 %v339
      %383 = vmatmul.mubr.bf16.gmra.mrb[0].mxu0 %v271
      %v384 = vpop.f32.mrb[0].mxu0
      %v385 = vadd.f32 %v245, %v384
      %v386 = vpop.f32.mrb[0].mxu0
      %v387 = vpop.f32.mrb[0].mxu0
      %v388 = vadd.f32 %v245, %v387
      %v389 = vpop.f32.mrb[0].mxu0
      %390 = vmatprep.mubr.bf16.mxu0 %v342
      %391 = vmatmul.mubr.bf16.gmra.mrb[0].mxu0 %v273
      %v392 = vpop.f32.mrb[0].mxu0
      %v393 = vadd.f32 %v245, %v392
      %v394 = vpop.f32.mrb[0].mxu0
      %v395 = vpop.f32.mrb[0].mxu0
      %v396 = vadd.f32 %v245, %v395
      %v397 = vpop.f32.mrb[0].mxu0
      %398 = vmatprep.mubr.bf16.mxu0 %v345
      %399 = vmatmul.mubr.bf16.gmra.mrb[0].mxu0 %v275
      %v400 = vpop.f32.mrb[0].mxu0
      %v401 = vadd.f32 %v245, %v400
      %v402 = vpop.f32.mrb[0].mxu0
      %v403 = vpop.f32.mrb[0].mxu0
      %v404 = vadd.f32 %v245, %v403
      %v405 = vpop.f32.mrb[0].mxu0
      %406 = vmatprep.mubr.bf16.mxu0 %v348
      %407 = vmatmul.mubr.bf16.gmra.mrb[0].mxu0 %v277
      %v408 = vpop.f32.mrb[0].mxu0
      %v409 = vadd.f32 %v245, %v408
      %v410 = vpop.f32.mrb[0].mxu0
      %v411 = vpop.f32.mrb[0].mxu0
      %v412 = vadd.f32 %v245, %v411
      %v413 = vpop.f32.mrb[0].mxu0
      %414 = vdwg.mxu0
      %v415 = vpack.c.bf16 %v388, %v385
      %v416 = vpack.c.bf16 %v396, %v393
      %v417 = vpack.c.bf16 %v404, %v401
      %v418 = vpack.c.bf16 %v412, %v409
      %v423 = vunpack.c.l.b16 %v415
      %v424 = vunpack.c.h.b16 %v415
      %v425 = vunpack.c.l.b16 %v416
      %v426 = vunpack.c.h.b16 %v416
      %v427 = vunpack.c.l.b16 %v417
      %v428 = vunpack.c.h.b16 %v417
      %v429 = vunpack.c.l.b16 %v418
      %v430 = vunpack.c.h.b16 %v418
      %v431 = vpack.c.b16 %v423, %v423
      %v432 = vpack.c.b16 %v424, %v424
      %v433 = vpack.c.b16 %v425, %v425
      %v434 = vpack.c.b16 %v426, %v426
      %v435 = vpack.c.b16 %v427, %v427
      %v436 = vpack.c.b16 %v428, %v428
      %v437 = vpack.c.b16 %v429, %v429
      %v438 = vpack.c.b16 %v430, %v430
      %447 = vst [vmem:[%s211] sm:$0xf] %v431
      %448 = vst [vmem:[%s211 + $0x4] sm:$0xf] %v432
      %449 = vst [vmem:[%s211 + $0x8] sm:$0xf] %v433
      %450 = vst [vmem:[%s211 + $0xc] sm:$0xf] %v434
      %451 = vst [vmem:[%s211 + $0x10] sm:$0xf] %v435
      %452 = vst [vmem:[%s211 + $0x14] sm:$0xf] %v436
      %453 = vst [vmem:[%s211 + $0x18] sm:$0xf] %v437
      %454 = vst [vmem:[%s211 + $0x1c] sm:$0xf] %v438
      %s455 = smul.u32 8, %s19
      %p456 = scmp.lt.s32.totalorder %s18, 1
      %s457 = scalar_select %p456, %s18, 1
      %p458 = scmp.lt.s32.totalorder %s455, 7
      %s459 = scalar_select %p458, %s455, 7
      %s460 = smul.addr %s457, 8
      %s461 = sadd.s32 %s459, %s460
      %s462 = smul.addr %s461, 4
      %s463 = scalar_lea.vmem %s3, %s462
      // Predicated region
      $region33: #{downsample_forward.1} parent=31 // pred_check
        %p464 = pneg %p116
      $region34: #{downsample_forward.1} parent=31 // pred_check_branch
        %466 = sbr.rel (%p464) target = $region36
      $region35: #{downsample_forward.1} parent=31 // pred_region
        %s467 = smul.u32 8, %s19
      $region36: #{downsample_forward.1} parent=31 // pred_fallthru
        _
    $region32: #{downsample_forward.1} parent=5 // pred_fallthru
      _
    %p468 = scmp.le.s32.totalorder 2, %s9
    // Predicated region
    $region37: #{downsample_forward.1} parent=5 // pred_check
      %p469 = pneg %p468
    $region38: #{downsample_forward.1} parent=5 // pred_check_branch
      %471 = sbr.rel (%p469) target = $region40
    $region39: #{downsample_forward.1} parent=5 // pred_region
      %s472 = ssub.s32 %s9, 2
      // Predicated region
      $region41: #{downsample_forward.1} parent=39 // pred_check
        %p473 = pneg %p122
      $region42: #{downsample_forward.1} parent=39 // pred_check_branch
        %475 = sbr.rel (%p473) target = $region44
      $region43: #{downsample_forward.1} parent=39 // pred_region
        %s476 = smul.u32 8, %s21
        %p477 = scmp.lt.s32.totalorder %s20, 1
        %s478 = scalar_select %p477, %s20, 1
        %p479 = scmp.lt.s32.totalorder %s476, 7
        %s480 = scalar_select %p479, %s476, 7
        %s481 = smul.addr %s478, 8
        %s482 = sadd.s32 %s480, %s481
        %s483 = smul.addr %s482, 4
        %s484 = scalar_lea.vmem %s3, %s483
      $region44: #{downsample_forward.1} parent=39 // pred_fallthru
        _
    $region40: #{downsample_forward.1} parent=5 // pred_fallthru
      _
  $region6: #{downsample_forward.1} parent=0 // loop_footer
    %s13 = sadd.s32 1, %s9
  $region7: #{downsample_forward.1} parent=0 // loop_footer_branch
    %8 = sbr.rel target = $region3
  $region8: #{downsample_forward.1} parent=0 // loop_exit
    _

</llo_original>
